<compile_context>
chip_gen: v6e
topology: v6e:2x2x1
jax: 0.10.0
libtpu: 0.0.40
codegen_flags: <defaults>
</compile_context>

<pallas_src>
import numpy as np
import jax
import jax.numpy as jnp
from jax.experimental import pallas as pl
from jax.experimental.pallas import tpu as pltpu

EPS = 0.003
HIDDEN = 128
OUT_PAD = 128          # lane-dense padded output width for fc3
MAX_TILE_B = 512       # batch tile cap (keeps per-step VMEM tiny, v7x-safe)


def _round_up(x, m):
    return ((x + m - 1) // m) * m


def mlp_kernel(x_ref, w1_ref, b1_ref, w2_ref, b2_ref, w3_ref, b3_ref, o_ref):
    """One batch tile: 3 bf16 MXU matmuls (f32 accum) + bias + ReLU on VPU."""
    x = x_ref[...]                                                     # bf16 [TB, S]
    h1 = jnp.dot(x, w1_ref[...], preferred_element_type=jnp.float32)  # f32 [TB, 128]
    h1 = jnp.maximum(h1 + b1_ref[...], 0.0).astype(jnp.bfloat16)
    h2 = jnp.dot(h1, w2_ref[...], preferred_element_type=jnp.float32)
    h2 = jnp.maximum(h2 + b2_ref[...], 0.0).astype(jnp.bfloat16)
    o_ref[...] = (
        jnp.dot(h2, w3_ref[...], preferred_element_type=jnp.float32) + b3_ref[...]
    )                                                                  # f32 [TB, 128]


def net_forward(state, params, action_dim):
    """state: [B, state_dim] float32 -> [B, action_dim] float32."""
    w1, b1, w2, b2, w3p, b3p = params
    B, state_dim = state.shape
    out_cols = w3p.shape[1]                      # padded (128)

    # Batch tiling: pad B up to a multiple of the tile (min tile granularity 8).
    tile_b = min(MAX_TILE_B, _round_up(B, 8))
    b_pad = _round_up(B, tile_b)
    x = state.astype(jnp.bfloat16)
    if b_pad != B:
        x = jnp.pad(x, ((0, b_pad - B), (0, 0)))

    grid = (b_pad // tile_b,)

    out = pl.pallas_call(
        mlp_kernel,
        out_shape=jax.ShapeDtypeStruct((b_pad, out_cols), jnp.float32),
        grid=grid,
        in_specs=[
            pl.BlockSpec((tile_b, state_dim), lambda i: (i, 0)),   # x (tiled)
            pl.BlockSpec((state_dim, HIDDEN), lambda i: (0, 0)),   # w1 (resident)
            pl.BlockSpec((1, HIDDEN),         lambda i: (0, 0)),   # b1
            pl.BlockSpec((HIDDEN, HIDDEN),    lambda i: (0, 0)),   # w2
            pl.BlockSpec((1, HIDDEN),         lambda i: (0, 0)),   # b2
            pl.BlockSpec((HIDDEN, out_cols),  lambda i: (0, 0)),   # w3 (padded)
            pl.BlockSpec((1, out_cols),       lambda i: (0, 0)),   # b3 (padded)
        ],
        out_specs=pl.BlockSpec((tile_b, out_cols), lambda i: (i, 0)),
        compiler_params=pltpu.CompilerParams(
            dimension_semantics=("parallel",),
            vmem_limit_bytes=64 * 1024 * 1024,
        ),
    )(x, w1, b1, w2, b2, w3p, b3p)

    return out[:B, :action_dim]


def fanin_init_jax(key, size, fanin=None):
    # Mirrors fanin_init: uniform(-v, v), v = 1/sqrt(size[0]) by default.
    fanin = fanin or size[0]
    v = 1.0 / np.sqrt(fanin)
    return jax.random.uniform(key, size, jnp.float32, minval=-v, maxval=v)


def init_params(key, state_dim, action_dim):
    """Parameter init mirroring NET.__init__ (shapes & ranges).

    PyTorch nn.Linear stores weight as [out, in]; fanin_init is applied to that
    shape (so fanin = out_features, as in the reference).  We init in that
    shape, transpose to [in, out] for x @ W, cast weights to bf16 for the MXU,
    and zero-pad fc3 to 128 output columns for lane-dense stores.
    """
    k = jax.random.split(key, 6)
    # fc1
    w1_t = fanin_init_jax(k[0], (HIDDEN, state_dim))                   # [out, in]
    b1 = jax.random.uniform(k[1], (1, HIDDEN), jnp.float32,
                            minval=-1.0 / np.sqrt(state_dim),
                            maxval=1.0 / np.sqrt(state_dim))
    # fc2
    w2_t = fanin_init_jax(k[2], (HIDDEN, HIDDEN))
    b2 = jax.random.uniform(k[3], (1, HIDDEN), jnp.float32,
                            minval=-1.0 / np.sqrt(HIDDEN),
                            maxval=1.0 / np.sqrt(HIDDEN))
    # fc3 (weight uniform(-EPS, EPS))
    w3_t = jax.random.uniform(k[4], (action_dim, HIDDEN), jnp.float32,
                              minval=-EPS, maxval=EPS)
    b3 = jax.random.uniform(k[5], (1, action_dim), jnp.float32,
                            minval=-1.0 / np.sqrt(HIDDEN),
                            maxval=1.0 / np.sqrt(HIDDEN))

    # Transpose to [in, out]; weights -> bf16 for the MXU; biases stay f32.
    w1 = w1_t.T.astype(jnp.bfloat16)
    w2 = w2_t.T.astype(jnp.bfloat16)
    w3 = w3_t.T                                   # [HIDDEN, action_dim], f32

    # Zero-pad fc3 output to 128 lanes (lane-dense output block).
    w3p = jnp.zeros((HIDDEN, OUT_PAD), jnp.float32).at[:, :action_dim].set(w3)
    w3p = w3p.astype(jnp.bfloat16)
    b3p = jnp.zeros((1, OUT_PAD), jnp.float32).at[:, :action_dim].set(b3)

    return (w1, b1, w2, b2, w3p, b3p)


def _reference(state, params, action_dim):
    """Plain-JAX reference with the same bf16 operand rounding as the kernel."""
    w1, b1, w2, b2, w3p, b3p = params
    x = state.astype(jnp.bfloat16)
    h1 = jnp.maximum(jnp.dot(x, w1, preferred_element_type=jnp.float32) + b1, 0.0)
    h1 = h1.astype(jnp.bfloat16)
    h2 = jnp.maximum(jnp.dot(h1, w2, preferred_element_type=jnp.float32) + b2, 0.0)
    h2 = h2.astype(jnp.bfloat16)
    out = jnp.dot(h2, w3p, preferred_element_type=jnp.float32) + b3p
    return out[:, :action_dim]


if __name__ == "__main__":
    key = jax.random.PRNGKey(0)
    k_param, k_state1, k_state2 = jax.random.split(key, 3)

    state_dim = 16
    action_dim = 4
    params = init_params(k_param, state_dim, action_dim)

    # Small batch (single grid step).
    batch = 8
    state = jax.random.normal(k_state1, (batch, state_dim), jnp.float32)
    out = net_forward(state, params, action_dim)
    jax.block_until_ready(out)
    ref = _reference(state, params, action_dim)
    np.testing.assert_allclose(np.asarray(out), np.asarray(ref), rtol=1e-3, atol=1e-3)
    assert out.shape == (batch, action_dim)

    # Non-multiple batch to exercise the grid + padding path.
    batch2 = 260
    state2 = jax.random.normal(k_state2, (batch2, state_dim), jnp.float32)
    out2 = net_forward(state2, params, action_dim)
    jax.block_until_ready(out2)
    ref2 = _reference(state2, params, action_dim)
    np.testing.assert_allclose(np.asarray(out2), np.asarray(ref2), rtol=1e-3, atol=1e-3)
    assert out2.shape == (batch2, action_dim)

    # TODO(synk): for RL-style repeated B~8 calls, amortize weight DMA across
    # calls (cross-pallas_call weight residency) instead of per-call reload.

    print("KERNEL_OK")
</pallas_src>

<mosaic_0001>
module attributes {stable_mosaic.version = 11 : i64} {
  func.func @mlp_kernel(%arg0: i32, %arg1: memref<8x16xbf16, #tpu.memory_space<vmem>>, %arg2: memref<16x128xbf16, #tpu.memory_space<vmem>>, %arg3: memref<1x128xf32, #tpu.memory_space<vmem>>, %arg4: memref<128x128xbf16, #tpu.memory_space<vmem>>, %arg5: memref<1x128xf32, #tpu.memory_space<vmem>>, %arg6: memref<128x128xbf16, #tpu.memory_space<vmem>>, %arg7: memref<1x128xf32, #tpu.memory_space<vmem>>, %arg8: memref<8x128xf32, #tpu.memory_space<vmem>>) attributes {dimension_semantics = [#tpu.dimension_semantics<parallel>], iteration_bounds = array<i64: 1>, scalar_prefetch = 0 : i64, scratch_operands = 0 : i64, tpu.core_type = #tpu.core_type<tc>, window_params = [{transform_indices = @transform_0, window_bounds = array<i64: 8, 16>}, {pipeline_mode = #tpu.pipeline_mode<synchronous>, transform_indices = @transform_1, window_bounds = array<i64: 16, 128>}, {pipeline_mode = #tpu.pipeline_mode<synchronous>, transform_indices = @transform_2, window_bounds = array<i64: 1, 128>}, {pipeline_mode = #tpu.pipeline_mode<synchronous>, transform_indices = @transform_3, window_bounds = array<i64: 128, 128>}, {pipeline_mode = #tpu.pipeline_mode<synchronous>, transform_indices = @transform_4, window_bounds = array<i64: 1, 128>}, {pipeline_mode = #tpu.pipeline_mode<synchronous>, transform_indices = @transform_5, window_bounds = array<i64: 128, 128>}, {pipeline_mode = #tpu.pipeline_mode<synchronous>, transform_indices = @transform_6, window_bounds = array<i64: 1, 128>}, {transform_indices = @transform_7, window_bounds = array<i64: 8, 128>}]} {
    %c0 = arith.constant 0 : index
    %c0_0 = arith.constant 0 : index
    %0 = vector.load %arg1[%c0, %c0_0] : memref<8x16xbf16, #tpu.memory_space<vmem>>, vector<8x16xbf16>
    %c0_1 = arith.constant 0 : index
    %c0_2 = arith.constant 0 : index
    %1 = vector.load %arg2[%c0_1, %c0_2] : memref<16x128xbf16, #tpu.memory_space<vmem>>, vector<16x128xbf16>
    %cst = arith.constant dense<0.000000e+00> : vector<8x128xf32>
    %2 = tpu.matmul %0, %1, %cst {dimension_numbers = #tpu.dot_dimension_numbers<[1], [0], [0], [1], [0, 0, 1, 1], [], []>} : vector<8x16xbf16>, vector<16x128xbf16>, vector<8x128xf32> -> vector<8x128xf32>
    %c0_3 = arith.constant 0 : index
    %c0_4 = arith.constant 0 : index
    %3 = vector.load %arg3[%c0_3, %c0_4] : memref<1x128xf32, #tpu.memory_space<vmem>>, vector<1x128xf32>
    %4 = vector.broadcast %3 : vector<1x128xf32> to vector<8x128xf32>
    %5 = arith.addf %2, %4 : vector<8x128xf32>
    %cst_5 = arith.constant 0.000000e+00 : f32
    %6 = vector.broadcast %cst_5 : f32 to vector<8x128xf32>
    %7 = arith.maximumf %5, %6 : vector<8x128xf32>
    %8 = arith.truncf %7 : vector<8x128xf32> to vector<8x128xbf16>
    %c0_6 = arith.constant 0 : index
    %c0_7 = arith.constant 0 : index
    %9 = vector.load %arg4[%c0_6, %c0_7] : memref<128x128xbf16, #tpu.memory_space<vmem>>, vector<128x128xbf16>
    %cst_8 = arith.constant dense<0.000000e+00> : vector<8x128xf32>
    %10 = tpu.matmul %8, %9, %cst_8 {dimension_numbers = #tpu.dot_dimension_numbers<[1], [0], [0], [1], [0, 0, 1, 1], [], []>} : vector<8x128xbf16>, vector<128x128xbf16>, vector<8x128xf32> -> vector<8x128xf32>
    %c0_9 = arith.constant 0 : index
    %c0_10 = arith.constant 0 : index
    %11 = vector.load %arg5[%c0_9, %c0_10] : memref<1x128xf32, #tpu.memory_space<vmem>>, vector<1x128xf32>
    %12 = vector.broadcast %11 : vector<1x128xf32> to vector<8x128xf32>
    %13 = arith.addf %10, %12 : vector<8x128xf32>
    %cst_11 = arith.constant 0.000000e+00 : f32
    %14 = vector.broadcast %cst_11 : f32 to vector<8x128xf32>
    %15 = arith.maximumf %13, %14 : vector<8x128xf32>
    %16 = arith.truncf %15 : vector<8x128xf32> to vector<8x128xbf16>
    %c0_12 = arith.constant 0 : index
    %c0_13 = arith.constant 0 : index
    %17 = vector.load %arg6[%c0_12, %c0_13] : memref<128x128xbf16, #tpu.memory_space<vmem>>, vector<128x128xbf16>
    %cst_14 = arith.constant dense<0.000000e+00> : vector<8x128xf32>
    %18 = tpu.matmul %16, %17, %cst_14 {dimension_numbers = #tpu.dot_dimension_numbers<[1], [0], [0], [1], [0, 0, 1, 1], [], []>} : vector<8x128xbf16>, vector<128x128xbf16>, vector<8x128xf32> -> vector<8x128xf32>
    %c0_15 = arith.constant 0 : index
    %c0_16 = arith.constant 0 : index
    %19 = vector.load %arg7[%c0_15, %c0_16] : memref<1x128xf32, #tpu.memory_space<vmem>>, vector<1x128xf32>
    %20 = vector.broadcast %19 : vector<1x128xf32> to vector<8x128xf32>
    %21 = arith.addf %18, %20 : vector<8x128xf32>
    %c0_17 = arith.constant 0 : index
    %c0_18 = arith.constant 0 : index
    %22 = vector.load %arg8[%c0_17, %c0_18] : memref<8x128xf32, #tpu.memory_space<vmem>>, vector<8x128xf32>
    tpu.vector_store %arg8[%c0_17, %c0_18], %21 {strides = array<i32>} : memref<8x128xf32, #tpu.memory_space<vmem>>, vector<8x128xf32>,
    return
  }
  func.func @transform_0(%arg0: i32) -> (i32, i32) {
    %c0_i32 = arith.constant 0 : i32
    %c0_i32_0 = arith.constant 0 : i32
    return %arg0, %c0_i32 : i32, i32
  }
  func.func @transform_1(%arg0: i32) -> (i32, i32) {
    %c0_i32 = arith.constant 0 : i32
    %c0_i32_0 = arith.constant 0 : i32
    %c0_i32_1 = arith.constant 0 : i32
    return %c0_i32, %c0_i32_0 : i32, i32
  }
  func.func @transform_2(%arg0: i32) -> (i32, i32) {
    %c0_i32 = arith.constant 0 : i32
    %c0_i32_0 = arith.constant 0 : i32
    %c0_i32_1 = arith.constant 0 : i32
    return %c0_i32, %c0_i32_0 : i32, i32
  }
  func.func @transform_3(%arg0: i32) -> (i32, i32) {
    %c0_i32 = arith.constant 0 : i32
    %c0_i32_0 = arith.constant 0 : i32
    %c0_i32_1 = arith.constant 0 : i32
    return %c0_i32, %c0_i32_0 : i32, i32
  }
  func.func @transform_4(%arg0: i32) -> (i32, i32) {
    %c0_i32 = arith.constant 0 : i32
    %c0_i32_0 = arith.constant 0 : i32
    %c0_i32_1 = arith.constant 0 : i32
    return %c0_i32, %c0_i32_0 : i32, i32
  }
  func.func @transform_5(%arg0: i32) -> (i32, i32) {
    %c0_i32 = arith.constant 0 : i32
    %c0_i32_0 = arith.constant 0 : i32
    %c0_i32_1 = arith.constant 0 : i32
    return %c0_i32, %c0_i32_0 : i32, i32
  }
  func.func @transform_6(%arg0: i32) -> (i32, i32) {
    %c0_i32 = arith.constant 0 : i32
    %c0_i32_0 = arith.constant 0 : i32
    %c0_i32_1 = arith.constant 0 : i32
    return %c0_i32, %c0_i32_0 : i32, i32
  }
  func.func @transform_7(%arg0: i32) -> (i32, i32) {
    %c0_i32 = arith.constant 0 : i32
    %c0_i32_0 = arith.constant 0 : i32
    return %arg0, %c0_i32 : i32, i32
  }
}

</mosaic_0001>

<llo_original>
// kernel: tpu_custom_call.1
$region0: #{tpu_custom_call.1}
  #allocation0 [shape = 'u32[]', space=smem, size = 0x4, offset = 0x4, fixed_abs, tag = 'smem constant byte address 0x4 - core index']
  #allocation1 [shape = 'u32[144,128]{1,0:T(1,128)}', space=vmem, size = 0x12000, scoped, tag = 'internal scratch']
  %s0 = inlined_call_operand.hbm [shape: bf16[8,16], index: 0, kind: input, shape index: {}]
  %s1 = inlined_call_operand.hbm [shape: bf16[16,128], index: 1, kind: input, shape index: {}]
  %s2 = inlined_call_operand.vmem [shape: f32[1,128], index: 2, kind: input, shape index: {}]
  %s3 = inlined_call_operand.hbm [shape: bf16[128,128], index: 3, kind: input, shape index: {}]
  %s4 = inlined_call_operand.vmem [shape: f32[1,128], index: 4, kind: input, shape index: {}]
  %s5 = inlined_call_operand.hbm [shape: bf16[128,128], index: 5, kind: input, shape index: {}]
  %s6 = inlined_call_operand.vmem [shape: f32[1,128], index: 6, kind: input, shape index: {}]
  %s7 = inlined_call_operand.hbm [shape: f32[8,128], index: 7, kind: output, shape index: {}]
  %s8 = sld [smem:[#allocation0]]
  $region54: #{tpu_custom_call.1} parent=0
    _
  %s10 = ssub.s32 1, %s8
  %s11 = scalar_select 0, %s10, %s8
  $region1: #{tpu_custom_call.1} parent=0
    #allocation2 [shape = 'u8[2048]{0}', space=vmem, size = 0x800, scoped, tag = 'input window, operand 0, single buffered']
    #allocation3 [shape = 's32[1]{0}', space=sflag, size = 0x4, scoped, tag = 'scoped memory for tpu_custom_call.1']
    #allocation4 [shape = 's32[1]{0}', space=sflag, size = 0x4, scoped, tag = 'scoped memory for tpu_custom_call.1']
    #allocation5 [shape = 'u8[4096]{0}', space=vmem, size = 0x1000, scoped, tag = 'input window, operand 1, single buffered']
    #allocation6 [shape = 's32[1]{0}', space=sflag, size = 0x4, scoped, tag = 'scoped memory for tpu_custom_call.1']
    #allocation7 [shape = 'u8[32768]{0}', space=vmem, size = 0x8000, scoped, tag = 'input window, operand 3, single buffered']
    #allocation8 [shape = 'u8[32768]{0}', space=vmem, size = 0x8000, scoped, tag = 'input window, operand 5, single buffered']
    #allocation9 [shape = 's32[1]{0}', space=sflag, size = 0x4, scoped, tag = 'scoped memory for tpu_custom_call.1']
    #allocation10 [shape = 'u8[4096]{0}', space=vmem, size = 0x1000, scoped, tag = 'output window, operand 0, single buffered']
    %12 = vsyncpa [#allocation3], 0
    %13 = vsyncpa [#allocation6], 0
    %14 = vsyncpa [#allocation9], 0
    %15 = vsyncpa [#allocation4], 0
    // Predicated region
    $region2: #{tpu_custom_call.1} parent=1 // pred_check
      _
    $region3: #{tpu_custom_call.1} parent=1 // pred_check_branch
      %17 = sbr.rel (0) target = $region5
    $region4: #{tpu_custom_call.1} parent=1 // pred_region
      %s19 = ssub.s32 64, 64
      %20 = vsyncadd [#allocation3], %s19
      %s22 = sshll.u32 [#allocation2], 4
      %s23 = int_to_ptr.vmem [resolvable:$true] %s22
      %25 = dma.hbm_to_vmem [thread:$0]  %s0, 64, %s23, [#allocation3]
    $region5: #{tpu_custom_call.1} parent=1 // pred_fallthru
      _
    // Predicated region
    $region6: #{tpu_custom_call.1} parent=1 // pred_check
      _
    $region7: #{tpu_custom_call.1} parent=1 // pred_check_branch
      %27 = sbr.rel (0) target = $region9
    $region8: #{tpu_custom_call.1} parent=1 // pred_region
      %s29 = ssub.s32 128, 128
      %30 = vsyncadd [#allocation6], %s29
      %s31 = sshll.u32 [#allocation5], 4
      %s32 = int_to_ptr.vmem [resolvable:$true] %s31
      %37 = dma.hbm_to_vmem [thread:$0]  %s1, 128, %s32, [#allocation6], 64, 64, 4
    $region9: #{tpu_custom_call.1} parent=1 // pred_fallthru
      _
    // Predicated region
    $region10: #{tpu_custom_call.1} parent=1 // pred_check
      _
    $region11: #{tpu_custom_call.1} parent=1 // pred_check_branch
      %39 = sbr.rel (0) target = $region13
    $region12: #{tpu_custom_call.1} parent=1 // pred_region
      _
    $region13: #{tpu_custom_call.1} parent=1 // pred_fallthru
      _
    // Predicated region
    $region14: #{tpu_custom_call.1} parent=1 // pred_check
      _
    $region15: #{tpu_custom_call.1} parent=1 // pred_check_branch
      %41 = sbr.rel (0) target = $region17
    $region16: #{tpu_custom_call.1} parent=1 // pred_region
      %s43 = ssub.s32 1024, 1024
      %44 = vsyncadd [#allocation6], %s43
      %s45 = sshll.u32 [#allocation7], 4
      %s46 = int_to_ptr.vmem [resolvable:$true] %s45
      %51 = dma.hbm_to_vmem [thread:$0]  %s3, 1024, %s46, [#allocation6], 64, 64, 4
    $region17: #{tpu_custom_call.1} parent=1 // pred_fallthru
      _
    // Predicated region
    $region18: #{tpu_custom_call.1} parent=1 // pred_check
      _
    $region19: #{tpu_custom_call.1} parent=1 // pred_check_branch
      %53 = sbr.rel (0) target = $region21
    $region20: #{tpu_custom_call.1} parent=1 // pred_region
      _
    $region21: #{tpu_custom_call.1} parent=1 // pred_fallthru
      _
    // Predicated region
    $region22: #{tpu_custom_call.1} parent=1 // pred_check
      _
    $region23: #{tpu_custom_call.1} parent=1 // pred_check_branch
      %55 = sbr.rel (0) target = $region25
    $region24: #{tpu_custom_call.1} parent=1 // pred_region
      %s57 = ssub.s32 1024, 1024
      %58 = vsyncadd [#allocation9], %s57
      %s59 = sshll.u32 [#allocation8], 4
      %s60 = int_to_ptr.vmem [resolvable:$true] %s59
      %65 = dma.hbm_to_vmem [thread:$0]  %s5, 1024, %s60, [#allocation9], 64, 64, 4
    $region25: #{tpu_custom_call.1} parent=1 // pred_fallthru
      _
    // Predicated region
    $region26: #{tpu_custom_call.1} parent=1 // pred_check
      _
    $region27: #{tpu_custom_call.1} parent=1 // pred_check_branch
      %67 = sbr.rel (0) target = $region29
    $region28: #{tpu_custom_call.1} parent=1 // pred_region
      _
    $region29: #{tpu_custom_call.1} parent=1 // pred_fallthru
      _
    // Predicated region
    $region30: #{tpu_custom_call.1} parent=1 // pred_check
      _
    $region31: #{tpu_custom_call.1} parent=1 // pred_check_branch
      %69 = sbr.rel (0) target = $region33
    $region32: #{tpu_custom_call.1} parent=1 // pred_region
      %70 = dma.done [#allocation3], 64
    $region33: #{tpu_custom_call.1} parent=1 // pred_fallthru
      _
    // Predicated region
    $region34: #{tpu_custom_call.1} parent=1 // pred_check
      _
    $region35: #{tpu_custom_call.1} parent=1 // pred_check_branch
      %72 = sbr.rel (0) target = $region37
    $region36: #{tpu_custom_call.1} parent=1 // pred_region
      %73 = dma.done [#allocation6], 128
    $region37: #{tpu_custom_call.1} parent=1 // pred_fallthru
      _
    // Predicated region
    $region38: #{tpu_custom_call.1} parent=1 // pred_check
      _
    $region39: #{tpu_custom_call.1} parent=1 // pred_check_branch
      %75 = sbr.rel (0) target = $region41
    $region40: #{tpu_custom_call.1} parent=1 // pred_region
      %76 = dma.done [#allocation6], 1024
    $region41: #{tpu_custom_call.1} parent=1 // pred_fallthru
      _
    // Predicated region
    $region42: #{tpu_custom_call.1} parent=1 // pred_check
      _
    $region43: #{tpu_custom_call.1} parent=1 // pred_check_branch
      %78 = sbr.rel (0) target = $region45
    $region44: #{tpu_custom_call.1} parent=1 // pred_region
      %79 = dma.done [#allocation9], 1024
    $region45: #{tpu_custom_call.1} parent=1 // pred_fallthru
      _
    %v81 = vld [vmem:[#allocation2] sm:$0xf]
    %v82 = vld [vmem:[#allocation5] sm:$0xf]
    %v83 = vld [vmem:[#allocation5 + $0x4] sm:$0xf]
    %v84 = vld [vmem:[%s2] sm:$0x1]
    %v86 = vlaneseq
    %v87 = vshrl.u32 %v86, 7
    %v88 = vsub.s32 0, %v87
    %v89 = vrot.slane %v84, %v88
    %v93 = vunpack.c.l.b16 %v82
    %v94 = vunpack.c.l.b16 %v83
    %v95 = vpack.c.b16 %v94, %v93
    %vm97 = vcmask 130048
    %v99 = vsel %vm97, %v81, 0
    %101 = vmatprep.subr.bf16.mxu0 0
    %102 = vmatpush1.bf16.msra.mxu0 0
    %103 = vmatprep.subr.bf16.mxu0 0
    %104 = vmatpush1.bf16.msra.mxu0 0
    %105 = vmatprep.subr.bf16.mxu0 0
    %106 = vmatpush1.bf16.msra.mxu0 0
    %107 = vmatprep.subr.bf16.mxu0 0
    %108 = vmatpush1.bf16.msra.mxu0 0
    %109 = vmatprep.subr.bf16.mxu0 0
    %110 = vmatpush1.bf16.msra.mxu0 0
    %111 = vmatprep.subr.bf16.mxu0 0
    %112 = vmatpush1.bf16.msra.mxu0 0
    %113 = vmatprep.subr.bf16.mxu0 0
    %114 = vmatpush1.bf16.msra.mxu0 0
    %115 = vmatprep.subr.bf16.mxu0 0
    %116 = vmatpush1.bf16.msra.mxu0 %v95
    %117 = vmatprep.subr.bf16.mxu0 0
    %118 = vmatpush2.bf16.msra.mxu0 0
    %119 = vmatprep.subr.bf16.mxu0 0
    %120 = vmatpush2.bf16.msra.mxu0 0
    %121 = vmatprep.subr.bf16.mxu0 0
    %122 = vmatpush2.bf16.msra.mxu0 0
    %123 = vmatprep.subr.bf16.mxu0 0
    %124 = vmatpush2.bf16.msra.mxu0 0
    %125 = vmatprep.subr.bf16.mxu0 0
    %126 = vmatpush2.bf16.msra.mxu0 0
    %127 = vmatprep.subr.bf16.mxu0 0
    %128 = vmatpush2.bf16.msra.mxu0 0
    %129 = vmatprep.subr.bf16.mxu0 0
    %130 = vmatpush2.bf16.msra.mxu0 0
    %131 = vmatprep.subr.bf16.mxu0 0
    %132 = vmatpush2.bf16.msra.mxu0 0
    %133 = vmatprep.mubr.bf16.mxu0 0
    %134 = vmatmul.mubr.bf16.gmra.mxu0 %v99
    %v135 = vpop.f32.mrf.mxu0
    %v136 = vadd.f32 %v89, %v135
    %v137 = vpop.f32.mrf.mxu0
    %v138 = vpop.f32.mrf.mxu0
    %v139 = vpop.f32.mrf.mxu0
    %140 = vdwg.mxu0
    %v141 = vmax.f32 %v136, 0.0
    %v142 = vpack.c.bf16 %v141, %v141
    %v143 = vld [vmem:[#allocation7] sm:$0xf]
    %v144 = vld [vmem:[#allocation7 + $0x4] sm:$0xf]
    %v145 = vld [vmem:[#allocation7 + $0x8] sm:$0xf]
    %v146 = vld [vmem:[#allocation7 + $0xc] sm:$0xf]
    %v147 = vld [vmem:[#allocation7 + $0x10] sm:$0xf]
    %v148 = vld [vmem:[#allocation7 + $0x14] sm:$0xf]
    %v149 = vld [vmem:[#allocation7 + $0x18] sm:$0xf]
    %v150 = vld [vmem:[#allocation7 + $0x1c] sm:$0xf]
    %v151 = vld [vmem:[#allocation7 + $0x20] sm:$0xf]
    %v152 = vld [vmem:[#allocation7 + $0x24] sm:$0xf]
    %v153 = vld [vmem:[#allocation7 + $0x28] sm:$0xf]
    %v154 = vld [vmem:[#allocation7 + $0x2c] sm:$0xf]
    %v155 = vld [vmem:[#allocation7 + $0x30] sm:$0xf]
    %v156 = vld [vmem:[#allocation7 + $0x34] sm:$0xf]
    %v157 = vld [vmem:[#allocation7 + $0x38] sm:$0xf]
    %v158 = vld [vmem:[#allocation7 + $0x3c] sm:$0xf]
    %v159 = vld [vmem:[%s4] sm:$0x1]
    %v161 = vlaneseq
    %v162 = vshrl.u32 %v161, 7
    %v163 = vsub.s32 0, %v162
    %v164 = vrot.slane %v159, %v163
    %v182 = vunpack.c.l.b16 %v143
    %v183 = vunpack.c.l.b16 %v144
    %v184 = vunpack.c.l.b16 %v145
    %v185 = vunpack.c.l.b16 %v146
    %v186 = vunpack.c.l.b16 %v147
    %v187 = vunpack.c.l.b16 %v148
    %v188 = vunpack.c.l.b16 %v149
    %v189 = vunpack.c.l.b16 %v150
    %v190 = vunpack.c.l.b16 %v151
    %v191 = vunpack.c.l.b16 %v152
    %v192 = vunpack.c.l.b16 %v153
    %v193 = vunpack.c.l.b16 %v154
    %v194 = vunpack.c.l.b16 %v155
    %v195 = vunpack.c.l.b16 %v156
    %v196 = vunpack.c.l.b16 %v157
    %v197 = vunpack.c.l.b16 %v158
    %v198 = vpack.c.b16 %v183, %v182
    %v199 = vpack.c.b16 %v185, %v184
    %v200 = vpack.c.b16 %v187, %v186
    %v201 = vpack.c.b16 %v189, %v188
    %v202 = vpack.c.b16 %v191, %v190
    %v203 = vpack.c.b16 %v193, %v192
    %v204 = vpack.c.b16 %v195, %v194
    %v205 = vpack.c.b16 %v197, %v196
    %214 = vmatprep.subr.bf16.mxu0 0
    %215 = vmatpush1.bf16.msra.mxu0 %v205
    %216 = vmatprep.subr.bf16.mxu0 0
    %217 = vmatpush1.bf16.msra.mxu0 %v204
    %218 = vmatprep.subr.bf16.mxu0 0
    %219 = vmatpush1.bf16.msra.mxu0 %v203
    %220 = vmatprep.subr.bf16.mxu0 0
    %221 = vmatpush1.bf16.msra.mxu0 %v202
    %222 = vmatprep.subr.bf16.mxu0 0
    %223 = vmatpush1.bf16.msra.mxu0 %v201
    %224 = vmatprep.subr.bf16.mxu0 0
    %225 = vmatpush1.bf16.msra.mxu0 %v200
    %226 = vmatprep.subr.bf16.mxu0 0
    %227 = vmatpush1.bf16.msra.mxu0 %v199
    %228 = vmatprep.subr.bf16.mxu0 0
    %229 = vmatpush1.bf16.msra.mxu0 %v198
    %230 = vmatprep.subr.bf16.mxu0 0
    %231 = vmatpush2.bf16.msra.mxu0 0
    %232 = vmatprep.subr.bf16.mxu0 0
    %233 = vmatpush2.bf16.msra.mxu0 0
    %234 = vmatprep.subr.bf16.mxu0 0
    %235 = vmatpush2.bf16.msra.mxu0 0
    %236 = vmatprep.subr.bf16.mxu0 0
    %237 = vmatpush2.bf16.msra.mxu0 0
    %238 = vmatprep.subr.bf16.mxu0 0
    %239 = vmatpush2.bf16.msra.mxu0 0
    %240 = vmatprep.subr.bf16.mxu0 0
    %241 = vmatpush2.bf16.msra.mxu0 0
    %242 = vmatprep.subr.bf16.mxu0 0
    %243 = vmatpush2.bf16.msra.mxu0 0
    %244 = vmatprep.subr.bf16.mxu0 0
    %245 = vmatpush2.bf16.msra.mxu0 0
    %246 = vmatprep.mubr.bf16.mxu0 0
    %247 = vmatmul.mubr.bf16.gmra.mxu0 %v142
    %v248 = vpop.f32.mrf.mxu0
    %v249 = vadd.f32 %v164, %v248
    %v250 = vpop.f32.mrf.mxu0
    %v251 = vpop.f32.mrf.mxu0
    %v252 = vpop.f32.mrf.mxu0
    %253 = vdwg.mxu0
    %v254 = vmax.f32 %v249, 0.0
    %v255 = vpack.c.bf16 %v254, %v254
    %v256 = vld [vmem:[#allocation8] sm:$0xf]
    %v257 = vld [vmem:[#allocation8 + $0x4] sm:$0xf]
    %v258 = vld [vmem:[#allocation8 + $0x8] sm:$0xf]
    %v259 = vld [vmem:[#allocation8 + $0xc] sm:$0xf]
    %v260 = vld [vmem:[#allocation8 + $0x10] sm:$0xf]
    %v261 = vld [vmem:[#allocation8 + $0x14] sm:$0xf]
    %v262 = vld [vmem:[#allocation8 + $0x18] sm:$0xf]
    %v263 = vld [vmem:[#allocation8 + $0x1c] sm:$0xf]
    %v264 = vld [vmem:[#allocation8 + $0x20] sm:$0xf]
    %v265 = vld [vmem:[#allocation8 + $0x24] sm:$0xf]
    %v266 = vld [vmem:[#allocation8 + $0x28] sm:$0xf]
    %v267 = vld [vmem:[#allocation8 + $0x2c] sm:$0xf]
    %v268 = vld [vmem:[#allocation8 + $0x30] sm:$0xf]
    %v269 = vld [vmem:[#allocation8 + $0x34] sm:$0xf]
    %v270 = vld [vmem:[#allocation8 + $0x38] sm:$0xf]
    %v271 = vld [vmem:[#allocation8 + $0x3c] sm:$0xf]
    %v272 = vld [vmem:[%s6] sm:$0x1]
    %v274 = vlaneseq
    %v275 = vshrl.u32 %v274, 7
    %v276 = vsub.s32 0, %v275
    %v277 = vrot.slane %v272, %v276
    %v295 = vunpack.c.l.b16 %v256
    %v296 = vunpack.c.l.b16 %v257
    %v297 = vunpack.c.l.b16 %v258
    %v298 = vunpack.c.l.b16 %v259
    %v299 = vunpack.c.l.b16 %v260
    %v300 = vunpack.c.l.b16 %v261
    %v301 = vunpack.c.l.b16 %v262
    %v302 = vunpack.c.l.b16 %v263
    %v303 = vunpack.c.l.b16 %v264
    %v304 = vunpack.c.l.b16 %v265
    %v305 = vunpack.c.l.b16 %v266
    %v306 = vunpack.c.l.b16 %v267
    %v307 = vunpack.c.l.b16 %v268
    %v308 = vunpack.c.l.b16 %v269
    %v309 = vunpack.c.l.b16 %v270
    %v310 = vunpack.c.l.b16 %v271
    %v311 = vpack.c.b16 %v296, %v295
    %v312 = vpack.c.b16 %v298, %v297
    %v313 = vpack.c.b16 %v300, %v299
    %v314 = vpack.c.b16 %v302, %v301
    %v315 = vpack.c.b16 %v304, %v303
    %v316 = vpack.c.b16 %v306, %v305
    %v317 = vpack.c.b16 %v308, %v307
    %v318 = vpack.c.b16 %v310, %v309
    %327 = vmatprep.subr.bf16.mxu0 0
    %328 = vmatpush1.bf16.msra.mxu0 %v318
    %329 = vmatprep.subr.bf16.mxu0 0
    %330 = vmatpush1.bf16.msra.mxu0 %v317
    %331 = vmatprep.subr.bf16.mxu0 0
    %332 = vmatpush1.bf16.msra.mxu0 %v316
    %333 = vmatprep.subr.bf16.mxu0 0
    %334 = vmatpush1.bf16.msra.mxu0 %v315
    %335 = vmatprep.subr.bf16.mxu0 0
    %336 = vmatpush1.bf16.msra.mxu0 %v314
    %337 = vmatprep.subr.bf16.mxu0 0
    %338 = vmatpush1.bf16.msra.mxu0 %v313
    %339 = vmatprep.subr.bf16.mxu0 0
    %340 = vmatpush1.bf16.msra.mxu0 %v312
    %341 = vmatprep.subr.bf16.mxu0 0
    %342 = vmatpush1.bf16.msra.mxu0 %v311
    %343 = vmatprep.subr.bf16.mxu0 0
    %344 = vmatpush2.bf16.msra.mxu0 0
    %345 = vmatprep.subr.bf16.mxu0 0
    %346 = vmatpush2.bf16.msra.mxu0 0
    %347 = vmatprep.subr.bf16.mxu0 0
    %348 = vmatpush2.bf16.msra.mxu0 0
    %349 = vmatprep.subr.bf16.mxu0 0
    %350 = vmatpush2.bf16.msra.mxu0 0
    %351 = vmatprep.subr.bf16.mxu0 0
    %352 = vmatpush2.bf16.msra.mxu0 0
    %353 = vmatprep.subr.bf16.mxu0 0
    %354 = vmatpush2.bf16.msra.mxu0 0
    %355 = vmatprep.subr.bf16.mxu0 0
    %356 = vmatpush2.bf16.msra.mxu0 0
    %357 = vmatprep.subr.bf16.mxu0 0
    %358 = vmatpush2.bf16.msra.mxu0 0
    %359 = vmatprep.mubr.bf16.mxu0 0
    %360 = vmatmul.mubr.bf16.gmra.mxu0 %v255
    %v361 = vpop.f32.mrf.mxu0
    %v362 = vadd.f32 %v277, %v361
    %v363 = vpop.f32.mrf.mxu0
    %v364 = vpop.f32.mrf.mxu0
    %v365 = vpop.f32.mrf.mxu0
    %366 = vdwg.mxu0
    %367 = vst [vmem:[#allocation10] sm:$0xff] %v362
    // Predicated region
    $region46: #{tpu_custom_call.1} parent=1 // pred_check
      _
    $region47: #{tpu_custom_call.1} parent=1 // pred_check_branch
      %369 = sbr.rel (0) target = $region49
    $region48: #{tpu_custom_call.1} parent=1 // pred_region
      %s371 = ssub.s32 128, 128
      %372 = vsyncadd [#allocation4], %s371
      %s374 = sshll.u32 [#allocation10], 4
      %s375 = int_to_ptr.vmem [resolvable:$true] %s374
      %377 = dma.vmem_to_hbm [thread:$0]  %s375, 128, %s7, [#allocation4]
    $region49: #{tpu_custom_call.1} parent=1 // pred_fallthru
      _
    // Predicated region
    $region50: #{tpu_custom_call.1} parent=1 // pred_check
      _
    $region51: #{tpu_custom_call.1} parent=1 // pred_check_branch
      %379 = sbr.rel (0) target = $region53
    $region52: #{tpu_custom_call.1} parent=1 // pred_region
      %380 = dma.done [#allocation4], 128
    $region53: #{tpu_custom_call.1} parent=1 // pred_fallthru
      _
    %381 = vsyncpa [#allocation3], 1
    %382 = vsyncpa [#allocation6], 1
    %383 = vsyncpa [#allocation9], 1
    %384 = vsyncpa [#allocation4], 1

</llo_original>
